<compile_context>
chip_gen: v5e
topology: v5e:2x2
jax: 0.10.0
libtpu: 0.0.40
codegen_flags: <defaults>
</compile_context>

<pallas_src>
import functools

import jax
import jax.numpy as jnp
from jax.experimental import pallas as pl
from jax.experimental.pallas import tpu as pltpu


def _cdiv(a, b):
    return -(-a // b)


# ---------------------------------------------------------------------------
# hardware-aware budgets
# ---------------------------------------------------------------------------
def _tpu_budgets():
    """Returns (per-step block byte target, vmem_limit cap)."""
    vmem_bytes = 64 << 20                      # conservative default (v7x per-TC)
    try:
        info = pltpu.get_tpu_info()
        v = getattr(info, "vmem_capacity_bytes", None)
        if v:
            vmem_bytes = int(v)
    except Exception:
        pass
    if vmem_bytes <= (64 << 20):
        # v7x: ~3.2 TB/s HBM -> bigger steps, but only 64 MiB VMEM per core.
        target, cap = 4 << 20, 52 << 20
    else:
        # v5e / v6e: 2-4 MiB steps already reach ~85% of HBM roofline.
        target, cap = 3 << 20, 96 << 20
    cap = max(24 << 20, min(cap, vmem_bytes - (8 << 20)))
    return target, cap


def _vmem_limit(io_block_bytes, f32_block_bytes, cap):
    # double-buffered in+out blocks + f32 temporaries + headroom, clamped.
    want = 4 * io_block_bytes + 6 * f32_block_bytes + (4 << 20)
    return int(min(cap, max(16 << 20, want)))


# ---------------------------------------------------------------------------
# tiling helpers (cdiv grids; Pallas masks ragged tail blocks)
# ---------------------------------------------------------------------------
def _lane_tile(full, col_bytes, target_bytes, prefer_split=False):
    """Tile along the lane (last) dim: full extent, or a multiple of 128."""
    if full <= 128:
        return full
    groups_total = _cdiv(full, 128)
    budget_groups = max(1, int(target_bytes // max(1, col_bytes * 128)))
    groups = min(groups_total, budget_groups)
    if prefer_split and groups_total >= 2:       # keep >=2 steps (v7x megacore)
        groups = min(groups, max(1, groups_total // 2))
    if groups >= groups_total:
        return full
    return 128 * groups


def _batch_tile(batch, per_item_bytes, target_bytes, other_steps):
    """Fold batch elements per block, keeping >=2 total grid steps if possible."""
    b_t = max(1, min(batch, int(target_bytes // max(1, per_item_bytes))))
    if batch >= 2 and other_steps * _cdiv(batch, b_t) < 2:
        b_t = _cdiv(batch, 2)
    return b_t


def _choose_fold(seq_len, channels):
    """Pick r | L so the folded lane dim F=r*C is >=128, with >=8 sublane rows
    and F a multiple of 128 / near 512 lanes when possible."""
    best = None
    for r in range(1, seq_len + 1):
        if seq_len % r:
            continue
        f = r * channels
        if f < 128:
            continue
        rows = seq_len // r
        score = (min(rows, 8), f % 128 == 0, -abs(f - 512))
        if best is None or score > best[0]:
            best = (score, r)
    return None if best is None else best[1]


# ---------------------------------------------------------------------------
# kernels
# ---------------------------------------------------------------------------
def _norm_kernel_folded(x_ref, g_ref, gt_ref, w_ref, b_ref,
                        y_ref, mean_ref, std_ref, *, eps, affine, seq_len):
    # x_ref: (b_t, R, F) lane-dense folded block; lane j <-> channel j % C.
    x = x_ref[...].astype(jnp.float32)
    g = g_ref[...]                                      # (F, C) one-hot lane->chan
    gt = gt_ref[...]                                    # (C, F) chan->lanes
    inv_len = 1.0 / float(seq_len)

    s = jnp.sum(x, axis=1)                              # (b_t, F) sublane reduce
    mean = jnp.dot(s, g, preferred_element_type=jnp.float32) * inv_len      # (b_t, C)
    mean_b = jnp.dot(mean, gt, preferred_element_type=jnp.float32)          # (b_t, F)

    xm = x - mean_b[:, None, :]                         # two-pass variance
    var = jnp.dot(jnp.sum(xm * xm, axis=1), g,
                  preferred_element_type=jnp.float32) * inv_len             # (b_t, C)
    std = jnp.sqrt(var + eps)
    inv = 1.0 / std                                     # exactly the applied inverse
    inv_b = jnp.dot(inv, gt, preferred_element_type=jnp.float32)            # (b_t, F)

    if affine:
        y = xm * (inv_b * w_ref[...])[:, None, :] + b_ref[...][:, None, :]
    else:
        y = xm * inv_b[:, None, :]
    y_ref[...] = y.astype(y_ref.dtype)
    mean_ref[...] = mean[:, None, :]
    std_ref[...] = std[:, None, :]


def _norm_kernel_natural(x_ref, w_ref, b_ref, y_ref, mean_ref, std_ref, *,
                         eps, affine):
    # x_ref: (b_t, L, c_t) block; stats over L (sublane axis), two-pass.
    x = x_ref[...].astype(jnp.float32)
    mean = jnp.mean(x, axis=1, keepdims=True)           # (b_t, 1, c_t)
    xm = x - mean
    var = jnp.mean(xm * xm, axis=1, keepdims=True)
    std = jnp.sqrt(var + eps)
    inv = 1.0 / std
    if affine:
        y = xm * (inv * w_ref[...]) + b_ref[...]
    else:
        y = xm * inv
    y_ref[...] = y.astype(y_ref.dtype)
    mean_ref[...] = mean
    std_ref[...] = std


def _denorm_kernel(x_ref, a_ref, c_ref, y_ref):
    # x_ref: (b_t, C, l_t), L on the lane axis; pure fma stream.
    x = x_ref[...].astype(jnp.float32)
    y_ref[...] = (x * a_ref[...] + c_ref[...]).astype(y_ref.dtype)


# ---------------------------------------------------------------------------
# module
# ---------------------------------------------------------------------------
class RevINPallas:
    """JAX/Pallas port of RevIN(num_features, eps, affine)."""

    def __init__(self, num_features: int, eps: float = 1e-5, affine: bool = True):
        self.num_features = num_features
        self.eps = float(eps)
        self.affine = affine
        self.affine_weight = jnp.ones((num_features,), jnp.float32)
        self.affine_bias = jnp.zeros((num_features,), jnp.float32)
        # TODO(synk): torch-style Python-side stats kept for API parity; prefer
        # the functional normalize()/denormalize() methods under jit/vmap.
        self.mean = None
        self.stdev = None

    def __call__(self, x, mode: str):
        if mode == "norm":
            y, self.mean, self.stdev = self.normalize(x)
            return y
        elif mode == "denorm":
            assert self.mean is not None and self.stdev is not None, \
                "call mode='norm' first to populate statistics"
            return self.denormalize(x, self.mean, self.stdev)
        raise NotImplementedError

    # --- mode == 'norm' : x is (B, L, C) ------------------------------------
    def normalize(self, x):
        B, L, C = x.shape
        target, cap = _tpu_budgets()
        itemsize = x.dtype.itemsize
        if C < 128 and L * C >= 128:
            return self._normalize_folded(x, target, cap, itemsize)
        return self._normalize_natural(x, target, cap, itemsize)

    def _normalize_folded(self, x, target, cap, itemsize):
        B, L, C = x.shape
        r = _choose_fold(L, C)
        R, F = L // r, r * C
        xf = x.reshape(B, R, F)                          # free reshape, no copy

        per_item_io = L * C * itemsize                   # x block; y costs the same
        b_t = _batch_tile(B, 2 * per_item_io, target, other_steps=1)
        grid = (_cdiv(B, b_t),)

        # Constant lane<->channel one-hot matrices drive the cross-group
        # reductions / broadcasts as tiny MXU matmuls (robust, no relayouts).
        lane = jnp.arange(F, dtype=jnp.int32)
        chan = jnp.arange(C, dtype=jnp.int32)
        g = (lane[:, None] % C == chan[None, :]).astype(jnp.float32)   # (F, C)
        gt = jnp.transpose(g)                                          # (C, F)
        wf = jnp.tile(self.affine_weight, r).reshape(1, F)
        bf = jnp.tile(self.affine_bias, r).reshape(1, F)

        kernel = functools.partial(_norm_kernel_folded, eps=self.eps,
                                   affine=self.affine, seq_len=L)
        block_io = 2 * b_t * per_item_io
        block_f32 = b_t * L * C * 4

        y, mean, std = pl.pallas_call(
            kernel,
            out_shape=(
                jax.ShapeDtypeStruct((B, R, F), x.dtype),
                jax.ShapeDtypeStruct((B, 1, C), jnp.float32),
                jax.ShapeDtypeStruct((B, 1, C), jnp.float32),
            ),
            grid_spec=pltpu.PrefetchScalarGridSpec(
                num_scalar_prefetch=0,
                grid=grid,
                in_specs=[
                    pl.BlockSpec((b_t, R, F), lambda i: (i, 0, 0)),   # x (folded)
                    pl.BlockSpec((F, C), lambda i: (0, 0)),           # G
                    pl.BlockSpec((C, F), lambda i: (0, 0)),           # G^T
                    pl.BlockSpec((1, F), lambda i: (0, 0)),           # weight (folded)
                    pl.BlockSpec((1, F), lambda i: (0, 0)),           # bias (folded)
                ],
                out_specs=[
                    pl.BlockSpec((b_t, R, F), lambda i: (i, 0, 0)),   # y (folded)
                    pl.BlockSpec((b_t, 1, C), lambda i: (i, 0, 0)),   # mean
                    pl.BlockSpec((b_t, 1, C), lambda i: (i, 0, 0)),   # stdev
                ],
            ),
            compiler_params=pltpu.CompilerParams(
                dimension_semantics=("parallel",),
                vmem_limit_bytes=_vmem_limit(block_io, block_f32, cap),
            ),
        )(xf, g, gt, wf, bf)
        return y.reshape(B, L, C), mean, std

    def _normalize_natural(self, x, target, cap, itemsize):
        B, L, C = x.shape
        c_t = _lane_tile(C, L * itemsize, target, prefer_split=(B == 1))
        per_item_io = L * c_t * itemsize
        b_t = _batch_tile(B, 2 * per_item_io, target, other_steps=_cdiv(C, c_t))
        grid = (_cdiv(B, b_t), _cdiv(C, c_t))

        w = self.affine_weight.reshape(1, 1, C)
        b = self.affine_bias.reshape(1, 1, C)
        kernel = functools.partial(_norm_kernel_natural, eps=self.eps,
                                   affine=self.affine)
        block_io = 2 * b_t * per_item_io
        block_f32 = b_t * L * c_t * 4

        y, mean, std = pl.pallas_call(
            kernel,
            out_shape=(
                jax.ShapeDtypeStruct((B, L, C), x.dtype),
                jax.ShapeDtypeStruct((B, 1, C), jnp.float32),
                jax.ShapeDtypeStruct((B, 1, C), jnp.float32),
            ),
            grid_spec=pltpu.PrefetchScalarGridSpec(
                num_scalar_prefetch=0,
                grid=grid,
                in_specs=[
                    pl.BlockSpec((b_t, L, c_t), lambda i, j: (i, 0, j)),  # x
                    pl.BlockSpec((1, 1, c_t), lambda i, j: (0, 0, j)),    # weight
                    pl.BlockSpec((1, 1, c_t), lambda i, j: (0, 0, j)),    # bias
                ],
                out_specs=[
                    pl.BlockSpec((b_t, L, c_t), lambda i, j: (i, 0, j)),  # y
                    pl.BlockSpec((b_t, 1, c_t), lambda i, j: (i, 0, j)),  # mean
                    pl.BlockSpec((b_t, 1, c_t), lambda i, j: (i, 0, j)),  # stdev
                ],
            ),
            compiler_params=pltpu.CompilerParams(
                dimension_semantics=("parallel", "parallel"),
                vmem_limit_bytes=_vmem_limit(block_io, block_f32, cap),
            ),
        )(x, w, b)
        return y, mean, std

    # --- mode == 'denorm' : x is (B, C, num_patches, patch_len) -------------
    def denormalize(self, x, mean, stdev):
        B, C, P, PLEN = x.shape
        L = P * PLEN
        assert mean.shape == (B, 1, C) and stdev.shape == (B, 1, C)
        target, cap = _tpu_budgets()
        itemsize = x.dtype.itemsize

        # Free reshapes only -- NO transposes around the kernel.
        x2 = x.reshape(B, C, L)
        mean_c = mean.reshape(B, C, 1)                   # (B,1,C)->(B,C,1) same bytes
        std_c = stdev.reshape(B, C, 1)
        if self.affine:
            w = self.affine_weight.reshape(1, C, 1)
            b = self.affine_bias.reshape(1, C, 1)
            a = std_c / (w + self.eps * self.eps)        # tiny (B*C) precompute
            c = mean_c - b * a
        else:
            a, c = std_c, mean_c

        l_t = _lane_tile(L, C * itemsize, target, prefer_split=(B == 1))
        per_item_io = C * l_t * itemsize
        b_t = _batch_tile(B, 2 * per_item_io, target, other_steps=_cdiv(L, l_t))
        grid = (_cdiv(B, b_t), _cdiv(L, l_t))
        block_io = 2 * b_t * per_item_io
        block_f32 = b_t * C * l_t * 4

        y = pl.pallas_call(
            _denorm_kernel,
            out_shape=jax.ShapeDtypeStruct((B, C, L), x.dtype),
            grid_spec=pltpu.PrefetchScalarGridSpec(
                num_scalar_prefetch=0,
                grid=grid,
                in_specs=[
                    pl.BlockSpec((b_t, C, l_t), lambda i, l: (i, 0, l)),  # x
                    pl.BlockSpec((b_t, C, 1), lambda i, l: (i, 0, 0)),    # a
                    pl.BlockSpec((b_t, C, 1), lambda i, l: (i, 0, 0)),    # c
                ],
                out_specs=pl.BlockSpec((b_t, C, l_t), lambda i, l: (i, 0, l)),
            ),
            compiler_params=pltpu.CompilerParams(
                dimension_semantics=("parallel", "parallel"),
                vmem_limit_bytes=_vmem_limit(block_io, block_f32, cap),
            ),
        )(x2, a, c)
        # torch: flatten + permute + unfold + transpose == free reshape here,
        # because the kernel already produced channel-major (B, C, L).
        return y.reshape(B, C, P, PLEN)


# ---------------------------------------------------------------------------
# demo / self-check
# ---------------------------------------------------------------------------
if __name__ == "__main__":
    key = jax.random.PRNGKey(0)
    B, L, C = 2, 128, 4          # batch, sequence_length, num_channels
    patch_len = 16
    P = L // patch_len

    base = jax.random.normal(key, (B, L, C), dtype=jnp.float32)
    offset = jnp.array([2.0, -3.0, 0.5, 7.0], jnp.float32).reshape(1, 1, C)
    x = base + offset            # per-channel offsets (non-stationary-ish)

    revin = RevINPallas(num_features=C, eps=1e-5, affine=True)

    # ---- norm (lane-dense folded path: (B, L, C) -> (B, L/r, r*C)) ----
    y = revin(x, "norm")
    jax.block_until_ready(y)

    mean_ref = jnp.mean(x, axis=1, keepdims=True)
    std_ref = jnp.sqrt(jnp.var(x, axis=1, keepdims=True) + 1e-5)
    y_ref = (x - mean_ref) / std_ref            # affine weight=1, bias=0
    assert jnp.allclose(y, y_ref, atol=1e-3, rtol=1e-3), "norm mismatch"
    assert jnp.allclose(revin.mean, mean_ref, atol=1e-4, rtol=1e-4), "mean mismatch"
    assert jnp.allclose(revin.stdev, std_ref, atol=1e-4, rtol=1e-4), "stdev mismatch"

    # ---- denorm: feed normalized data re-patched as (B, C, P, patch_len) ----
    patches = y.reshape(B, P, patch_len, C).transpose(0, 3, 1, 2)
    x_rec = revin(patches, "denorm")
    jax.block_until_ready(x_rec)

    x_rec_flat = x_rec.transpose(0, 2, 3, 1).reshape(B, L, C)
    assert jnp.allclose(x_rec_flat, x, atol=1e-3, rtol=1e-3), "denorm mismatch"

    print("KERNEL_OK")
</pallas_src>

<mosaic_0001>
module attributes {stable_mosaic.version = 11 : i64} {
  func.func @_norm_kernel_folded(%arg0: i32, %arg1: memref<1x4x128xf32, #tpu.memory_space<vmem>>, %arg2: memref<128x4xf32, #tpu.memory_space<vmem>>, %arg3: memref<4x128xf32, #tpu.memory_space<vmem>>, %arg4: memref<1x128xf32, #tpu.memory_space<vmem>>, %arg5: memref<1x128xf32, #tpu.memory_space<vmem>>, %arg6: memref<1x4x128xf32, #tpu.memory_space<vmem>>, %arg7: memref<1x1x4xf32, #tpu.memory_space<vmem>>, %arg8: memref<1x1x4xf32, #tpu.memory_space<vmem>>) attributes {dimension_semantics = [#tpu.dimension_semantics<parallel>], iteration_bounds = array<i64: 2>, scalar_prefetch = 0 : i64, scratch_operands = 0 : i64, tpu.core_type = #tpu.core_type<tc>, window_params = [{transform_indices = @transform_0, window_bounds = array<i64: 1, 4, 128>}, {pipeline_mode = #tpu.pipeline_mode<synchronous>, transform_indices = @transform_1, window_bounds = array<i64: 128, 4>}, {pipeline_mode = #tpu.pipeline_mode<synchronous>, transform_indices = @transform_2, window_bounds = array<i64: 4, 128>}, {pipeline_mode = #tpu.pipeline_mode<synchronous>, transform_indices = @transform_3, window_bounds = array<i64: 1, 128>}, {pipeline_mode = #tpu.pipeline_mode<synchronous>, transform_indices = @transform_4, window_bounds = array<i64: 1, 128>}, {transform_indices = @transform_5, window_bounds = array<i64: 1, 4, 128>}, {transform_indices = @transform_6, window_bounds = array<i64: 1, 1, 4>}, {transform_indices = @transform_7, window_bounds = array<i64: 1, 1, 4>}]} {
    %c0 = arith.constant 0 : index
    %c0_0 = arith.constant 0 : index
    %c0_1 = arith.constant 0 : index
    %0 = vector.load %arg1[%c0, %c0_0, %c0_1] : memref<1x4x128xf32, #tpu.memory_space<vmem>>, vector<1x4x128xf32>
    %c0_2 = arith.constant 0 : index
    %c0_3 = arith.constant 0 : index
    %1 = vector.load %arg2[%c0_2, %c0_3] : memref<128x4xf32, #tpu.memory_space<vmem>>, vector<128x4xf32>
    %c0_4 = arith.constant 0 : index
    %c0_5 = arith.constant 0 : index
    %2 = vector.load %arg3[%c0_4, %c0_5] : memref<4x128xf32, #tpu.memory_space<vmem>>, vector<4x128xf32>
    %cst = arith.constant dense<0.000000e+00> : vector<1x128xf32>
    %3 = vector.multi_reduction <add>, %0, %cst [1] : vector<1x4x128xf32> to vector<1x128xf32>
    %cst_6 = arith.constant dense<0.000000e+00> : vector<1x4xf32>
    %4 = tpu.matmul %3, %1, %cst_6 {dimension_numbers = #tpu.dot_dimension_numbers<[1], [0], [0], [1], [0, 0, 1, 1], [], []>} : vector<1x128xf32>, vector<128x4xf32>, vector<1x4xf32> -> vector<1x4xf32>
    %cst_7 = arith.constant 7.812500e-03 : f32
    %5 = vector.broadcast %cst_7 : f32 to vector<1x4xf32>
    %6 = arith.mulf %4, %5 : vector<1x4xf32>
    %cst_8 = arith.constant dense<0.000000e+00> : vector<1x128xf32>
    %7 = tpu.matmul %6, %2, %cst_8 {dimension_numbers = #tpu.dot_dimension_numbers<[1], [0], [0], [1], [0, 0, 1, 1], [], []>} : vector<1x4xf32>, vector<4x128xf32>, vector<1x128xf32> -> vector<1x128xf32>
    %8 = vector.shape_cast %7 : vector<1x128xf32> to vector<1x1x128xf32>
    %9 = vector.broadcast %8 : vector<1x1x128xf32> to vector<1x4x128xf32>
    %10 = arith.subf %0, %9 : vector<1x4x128xf32>
    %11 = arith.mulf %10, %10 : vector<1x4x128xf32>
    %cst_9 = arith.constant dense<0.000000e+00> : vector<1x128xf32>
    %12 = vector.multi_reduction <add>, %11, %cst_9 [1] : vector<1x4x128xf32> to vector<1x128xf32>
    %cst_10 = arith.constant dense<0.000000e+00> : vector<1x4xf32>
    %13 = tpu.matmul %12, %1, %cst_10 {dimension_numbers = #tpu.dot_dimension_numbers<[1], [0], [0], [1], [0, 0, 1, 1], [], []>} : vector<1x128xf32>, vector<128x4xf32>, vector<1x4xf32> -> vector<1x4xf32>
    %cst_11 = arith.constant 7.812500e-03 : f32
    %14 = vector.broadcast %cst_11 : f32 to vector<1x4xf32>
    %15 = arith.mulf %13, %14 : vector<1x4xf32>
    %cst_12 = arith.constant 9.99999974E-6 : f32
    %16 = vector.broadcast %cst_12 : f32 to vector<1x4xf32>
    %17 = arith.addf %15, %16 : vector<1x4xf32>
    %18 = math.sqrt %17 : vector<1x4xf32>
    %cst_13 = arith.constant 1.000000e+00 : f32
    %19 = vector.broadcast %cst_13 : f32 to vector<1x4xf32>
    %20 = arith.divf %19, %18 : vector<1x4xf32>
    %cst_14 = arith.constant dense<0.000000e+00> : vector<1x128xf32>
    %21 = tpu.matmul %20, %2, %cst_14 {dimension_numbers = #tpu.dot_dimension_numbers<[1], [0], [0], [1], [0, 0, 1, 1], [], []>} : vector<1x4xf32>, vector<4x128xf32>, vector<1x128xf32> -> vector<1x128xf32>
    %c0_15 = arith.constant 0 : index
    %c0_16 = arith.constant 0 : index
    %22 = vector.load %arg4[%c0_15, %c0_16] : memref<1x128xf32, #tpu.memory_space<vmem>>, vector<1x128xf32>
    %23 = arith.mulf %21, %22 : vector<1x128xf32>
    %24 = vector.shape_cast %23 : vector<1x128xf32> to vector<1x1x128xf32>
    %25 = vector.broadcast %24 : vector<1x1x128xf32> to vector<1x4x128xf32>
    %26 = arith.mulf %10, %25 : vector<1x4x128xf32>
    %c0_17 = arith.constant 0 : index
    %c0_18 = arith.constant 0 : index
    %27 = vector.load %arg5[%c0_17, %c0_18] : memref<1x128xf32, #tpu.memory_space<vmem>>, vector<1x128xf32>
    %28 = vector.shape_cast %27 : vector<1x128xf32> to vector<1x1x128xf32>
    %29 = vector.broadcast %28 : vector<1x1x128xf32> to vector<1x4x128xf32>
    %30 = arith.addf %26, %29 : vector<1x4x128xf32>
    %c0_19 = arith.constant 0 : index
    %c0_20 = arith.constant 0 : index
    %c0_21 = arith.constant 0 : index
    %31 = vector.load %arg6[%c0_19, %c0_20, %c0_21] : memref<1x4x128xf32, #tpu.memory_space<vmem>>, vector<1x4x128xf32>
    tpu.vector_store %arg6[%c0_19, %c0_20, %c0_21], %30 {strides = array<i32>} : memref<1x4x128xf32, #tpu.memory_space<vmem>>, vector<1x4x128xf32>,
    %32 = vector.shape_cast %6 : vector<1x4xf32> to vector<1x1x4xf32>
    %c0_22 = arith.constant 0 : index
    %c0_23 = arith.constant 0 : index
    %c0_24 = arith.constant 0 : index
    %33 = vector.load %arg7[%c0_22, %c0_23, %c0_24] : memref<1x1x4xf32, #tpu.memory_space<vmem>>, vector<1x1x4xf32>
    tpu.vector_store %arg7[%c0_22, %c0_23, %c0_24], %32 {strides = array<i32>} : memref<1x1x4xf32, #tpu.memory_space<vmem>>, vector<1x1x4xf32>,
    %34 = vector.shape_cast %18 : vector<1x4xf32> to vector<1x1x4xf32>
    %c0_25 = arith.constant 0 : index
    %c0_26 = arith.constant 0 : index
    %c0_27 = arith.constant 0 : index
    %35 = vector.load %arg8[%c0_25, %c0_26, %c0_27] : memref<1x1x4xf32, #tpu.memory_space<vmem>>, vector<1x1x4xf32>
    tpu.vector_store %arg8[%c0_25, %c0_26, %c0_27], %34 {strides = array<i32>} : memref<1x1x4xf32, #tpu.memory_space<vmem>>, vector<1x1x4xf32>,
    return
  }
  func.func @transform_0(%arg0: i32) -> (i32, i32, i32) {
    %c0_i32 = arith.constant 0 : i32
    %c0_i32_0 = arith.constant 0 : i32
    %c0_i32_1 = arith.constant 0 : i32
    return %arg0, %c0_i32, %c0_i32_0 : i32, i32, i32
  }
  func.func @transform_1(%arg0: i32) -> (i32, i32) {
    %c0_i32 = arith.constant 0 : i32
    %c0_i32_0 = arith.constant 0 : i32
    %c0_i32_1 = arith.constant 0 : i32
    return %c0_i32, %c0_i32_0 : i32, i32
  }
  func.func @transform_2(%arg0: i32) -> (i32, i32) {
    %c0_i32 = arith.constant 0 : i32
    %c0_i32_0 = arith.constant 0 : i32
    %c0_i32_1 = arith.constant 0 : i32
    return %c0_i32, %c0_i32_0 : i32, i32
  }
  func.func @transform_3(%arg0: i32) -> (i32, i32) {
    %c0_i32 = arith.constant 0 : i32
    %c0_i32_0 = arith.constant 0 : i32
    %c0_i32_1 = arith.constant 0 : i32
    return %c0_i32, %c0_i32_0 : i32, i32
  }
  func.func @transform_4(%arg0: i32) -> (i32, i32) {
    %c0_i32 = arith.constant 0 : i32
    %c0_i32_0 = arith.constant 0 : i32
    %c0_i32_1 = arith.constant 0 : i32
    return %c0_i32, %c0_i32_0 : i32, i32
  }
  func.func @transform_5(%arg0: i32) -> (i32, i32, i32) {
    %c0_i32 = arith.constant 0 : i32
    %c0_i32_0 = arith.constant 0 : i32
    %c0_i32_1 = arith.constant 0 : i32
    return %arg0, %c0_i32, %c0_i32_0 : i32, i32, i32
  }
  func.func @transform_6(%arg0: i32) -> (i32, i32, i32) {
    %c0_i32 = arith.constant 0 : i32
    %c0_i32_0 = arith.constant 0 : i32
    %c0_i32_1 = arith.constant 0 : i32
    return %arg0, %c0_i32, %c0_i32_0 : i32, i32, i32
  }
  func.func @transform_7(%arg0: i32) -> (i32, i32, i32) {
    %c0_i32 = arith.constant 0 : i32
    %c0_i32_0 = arith.constant 0 : i32
    %c0_i32_1 = arith.constant 0 : i32
    return %arg0, %c0_i32, %c0_i32_0 : i32, i32, i32
  }
}

</mosaic_0001>

<llo_original>
// kernel: tpu_custom_call.1
$region0: #{tpu_custom_call.1}
  #allocation0 [shape = 'u32[]', space=smem, size = 0x4, offset = 0x4, fixed_abs, tag = 'smem constant byte address 0x4 - core index']
  #allocation1 [shape = 'u32[72,128]{1,0:T(1,128)}', space=vmem, size = 0x9000, scoped, tag = 'internal scratch']
  %s0 = inlined_call_operand.vmem [shape: f32[2,4,128], index: 0, kind: input, shape index: {}]
  %s1 = inlined_call_operand.vmem [shape: f32[128,4], index: 1, kind: input, shape index: {}]
  %s2 = inlined_call_operand.vmem [shape: f32[4,128], index: 2, kind: input, shape index: {}]
  %s3 = inlined_call_operand.vmem [shape: f32[1,128], index: 3, kind: input, shape index: {}]
  %s4 = inlined_call_operand.vmem [shape: f32[1,128], index: 4, kind: input, shape index: {}]
  %s5 = inlined_call_operand.hbm [shape: f32[2,4,128], index: 5, kind: output, shape index: {0}]
  %s6 = inlined_call_operand.hbm [shape: f32[2,1,4], index: 6, kind: output, shape index: {1}]
  %s7 = inlined_call_operand.hbm [shape: f32[2,1,4], index: 7, kind: output, shape index: {2}]
  %8 = xla_tuple %s5, %s6, %s7
  %s9 = sld [smem:[#allocation0]]
  $region69: #{tpu_custom_call.1} parent=0
    _
  %s11 = ssub.s32 1, %s9
  %s12 = scalar_select 0, %s11, %s9
  $region1: #{tpu_custom_call.1} parent=0
    #allocation2 [shape = 'u8[4096]{0}', space=vmem, size = 0x1000, scoped, tag = 'output window, operand 0']
    #allocation3 [shape = 's32[2]{0}', space=sflag, size = 0x8, scoped, tag = 'scoped memory for tpu_custom_call.1']
    #allocation4 [shape = 'u8[1024]{0}', space=vmem, size = 0x400, scoped, tag = 'output window, operand 1']
    #allocation5 [shape = 's32[2]{0}', space=sflag, size = 0x8, scoped, tag = 'scoped memory for tpu_custom_call.1']
    #allocation6 [shape = 'u8[1024]{0}', space=vmem, size = 0x400, scoped, tag = 'output window, operand 2']
    %13 = vsyncpa [#allocation3], 0
    %s14 = scalar_lea.sflag [#allocation3], 1
    %15 = vsyncpa %s14, 0
    %16 = vsyncpa [#allocation5], 0
    %s17 = scalar_lea.sflag [#allocation5], 1
    %18 = vsyncpa %s17, 0
    loop: start=0, step=1, limit=4
    $region2: #{tpu_custom_call.1} parent=1 // loop_pre_header
      _
    $region3: #{tpu_custom_call.1} parent=1 // loop_header
      %s20 = sphi 0, %s24
      %p21 = scmp.ge.s32.totalorder %s20, 4
      %s30 = sphi 0, %s32
      %s33 = sphi 0, %s30
      %s34 = sphi 0, %s33
      %s50 = sphi 0, %s34
      %s54 = sphi 0, %s54
      %s56 = sphi 0, %s54
      %s57 = sphi 0, %s56
      %s71 = sphi 0, %s57
      %s75 = sphi 0, %s75
      %s77 = sphi 0, %s75
      %s78 = sphi 0, %s77
      %s92 = sphi 0, %s78
      %s96 = sphi 0, %s96
      %s98 = sphi 0, %s96
      %s99 = sphi 0, %s98
      %s113 = sphi 0, %s99
      %s117 = sphi 0, %s117
      %s119 = sphi 0, %s117
      %s120 = sphi 0, %s119
      %s134 = sphi 0, %s120
      %s140 = sphi 0, %s142
      %s143 = sphi 0, %s140
      %s144 = sphi 0, %s143
      %s160 = sphi 0, %s144
      %s166 = sphi 0, %s168
      %s169 = sphi 0, %s166
      %s170 = sphi 0, %s169
      %s186 = sphi 0, %s170
      %s192 = sphi 0, %s194
      %s195 = sphi 0, %s192
      %s196 = sphi 0, %s195
      %s212 = sphi 0, %s196
    $region4: #{tpu_custom_call.1} parent=1 // loop_header_branch
      %23 = sbr.rel (%p21) target = $region8
    $region5: #{tpu_custom_call.1} parent=1 // loop_body
      %s25 = ssub.s32 %s20, 1
      %s26 = ssub.s32 %s20, 2
      %s27 = sadd.s32 %s20, 1
      %s28 = ssub.s32 %s20, %s27
      %p29 = scmp.eq.s32.totalorder %s28, 0
      %s31 = sadd.s32 %s30, 1
      %s32 = scalar_select %p29, %s30, %s31
      %p35 = pneg %p29
      %p36 = scmp.eq.s32.totalorder %s20, 1
      %p37 = por %p35, %p36
      %p38 = scmp.ne.s32.totalorder %s30, %s33
      %p39 = scmp.eq.s32.totalorder %s20, 0
      %p40 = por %p38, %p39
      %p41 = scmp.ne.s32.totalorder %s30, %s33
      %p42 = scmp.eq.s32.totalorder %s25, 1
      %p43 = por %p41, %p42
      %p44 = scmp.ne.s32.totalorder %s33, %s34
      %p45 = scmp.eq.s32.totalorder %s25, 0
      %p46 = por %p44, %p45
      %p47 = scmp.ne.s32.totalorder %s33, %s34
      %p48 = scmp.eq.s32.totalorder %s26, 1
      %p49 = por %p47, %p48
      %p51 = scmp.ne.s32.totalorder %s34, %s50
      %p52 = scmp.eq.s32.totalorder %s26, 0
      %p53 = por %p51, %p52
      %s55 = sadd.s32 %s54, 1
      %p58 = scmp.eq.s32.totalorder %s20, 1
      %p59 = scmp.ne.s32.totalorder %s54, %s56
      %p60 = scmp.eq.s32.totalorder %s20, 0
      %p61 = por %p59, %p60
      %p62 = scmp.ne.s32.totalorder %s54, %s56
      %p63 = scmp.eq.s32.totalorder %s25, 1
      %p64 = por %p62, %p63
      %p65 = scmp.ne.s32.totalorder %s56, %s57
      %p66 = scmp.eq.s32.totalorder %s25, 0
      %p67 = por %p65, %p66
      %p68 = scmp.ne.s32.totalorder %s56, %s57
      %p69 = scmp.eq.s32.totalorder %s26, 1
      %p70 = por %p68, %p69
      %p72 = scmp.ne.s32.totalorder %s57, %s71
      %p73 = scmp.eq.s32.totalorder %s26, 0
      %p74 = por %p72, %p73
      %s76 = sadd.s32 %s75, 1
      %p79 = scmp.eq.s32.totalorder %s20, 1
      %p80 = scmp.ne.s32.totalorder %s75, %s77
      %p81 = scmp.eq.s32.totalorder %s20, 0
      %p82 = por %p80, %p81
      %p83 = scmp.ne.s32.totalorder %s75, %s77
      %p84 = scmp.eq.s32.totalorder %s25, 1
      %p85 = por %p83, %p84
      %p86 = scmp.ne.s32.totalorder %s77, %s78
      %p87 = scmp.eq.s32.totalorder %s25, 0
      %p88 = por %p86, %p87
      %p89 = scmp.ne.s32.totalorder %s77, %s78
      %p90 = scmp.eq.s32.totalorder %s26, 1
      %p91 = por %p89, %p90
      %p93 = scmp.ne.s32.totalorder %s78, %s92
      %p94 = scmp.eq.s32.totalorder %s26, 0
      %p95 = por %p93, %p94
      %s97 = sadd.s32 %s96, 1
      %p100 = scmp.eq.s32.totalorder %s20, 1
      %p101 = scmp.ne.s32.totalorder %s96, %s98
      %p102 = scmp.eq.s32.totalorder %s20, 0
      %p103 = por %p101, %p102
      %p104 = scmp.ne.s32.totalorder %s96, %s98
      %p105 = scmp.eq.s32.totalorder %s25, 1
      %p106 = por %p104, %p105
      %p107 = scmp.ne.s32.totalorder %s98, %s99
      %p108 = scmp.eq.s32.totalorder %s25, 0
      %p109 = por %p107, %p108
      %p110 = scmp.ne.s32.totalorder %s98, %s99
      %p111 = scmp.eq.s32.totalorder %s26, 1
      %p112 = por %p110, %p111
      %p114 = scmp.ne.s32.totalorder %s99, %s113
      %p115 = scmp.eq.s32.totalorder %s26, 0
      %p116 = por %p114, %p115
      %s118 = sadd.s32 %s117, 1
      %p121 = scmp.eq.s32.totalorder %s20, 1
      %p122 = scmp.ne.s32.totalorder %s117, %s119
      %p123 = scmp.eq.s32.totalorder %s20, 0
      %p124 = por %p122, %p123
      %p125 = scmp.ne.s32.totalorder %s117, %s119
      %p126 = scmp.eq.s32.totalorder %s25, 1
      %p127 = por %p125, %p126
      %p128 = scmp.ne.s32.totalorder %s119, %s120
      %p129 = scmp.eq.s32.totalorder %s25, 0
      %p130 = por %p128, %p129
      %p131 = scmp.ne.s32.totalorder %s119, %s120
      %p132 = scmp.eq.s32.totalorder %s26, 1
      %p133 = por %p131, %p132
      %p135 = scmp.ne.s32.totalorder %s120, %s134
      %p136 = scmp.eq.s32.totalorder %s26, 0
      %p137 = por %p135, %p136
      %s138 = ssub.s32 %s20, %s27
      %p139 = scmp.eq.s32.totalorder %s138, 0
      %s141 = sadd.s32 %s140, 1
      %s142 = scalar_select %p139, %s140, %s141
      %p145 = pneg %p139
      %p146 = scmp.eq.s32.totalorder %s20, 1
      %p147 = por %p145, %p146
      %p148 = scmp.ne.s32.totalorder %s140, %s143
      %p149 = scmp.eq.s32.totalorder %s20, 0
      %p150 = por %p148, %p149
      %p151 = scmp.ne.s32.totalorder %s140, %s143
      %p152 = scmp.eq.s32.totalorder %s25, 1
      %p153 = por %p151, %p152
      %p154 = scmp.ne.s32.totalorder %s143, %s144
      %p155 = scmp.eq.s32.totalorder %s25, 0
      %p156 = por %p154, %p155
      %p157 = scmp.ne.s32.totalorder %s143, %s144
      %p158 = scmp.eq.s32.totalorder %s26, 1
      %p159 = por %p157, %p158
      %p161 = scmp.ne.s32.totalorder %s144, %s160
      %p162 = scmp.eq.s32.totalorder %s26, 0
      %p163 = por %p161, %p162
      %s164 = ssub.s32 %s20, %s27
      %p165 = scmp.eq.s32.totalorder %s164, 0
      %s167 = sadd.s32 %s166, 1
      %s168 = scalar_select %p165, %s166, %s167
      %p171 = pneg %p165
      %p172 = scmp.eq.s32.totalorder %s20, 1
      %p173 = por %p171, %p172
      %p174 = scmp.ne.s32.totalorder %s166, %s169
      %p175 = scmp.eq.s32.totalorder %s20, 0
      %p176 = por %p174, %p175
      %p177 = scmp.ne.s32.totalorder %s166, %s169
      %p178 = scmp.eq.s32.totalorder %s25, 1
      %p179 = por %p177, %p178
      %p180 = scmp.ne.s32.totalorder %s169, %s170
      %p181 = scmp.eq.s32.totalorder %s25, 0
      %p182 = por %p180, %p181
      %p183 = scmp.ne.s32.totalorder %s169, %s170
      %p184 = scmp.eq.s32.totalorder %s26, 1
      %p185 = por %p183, %p184
      %p187 = scmp.ne.s32.totalorder %s170, %s186
      %p188 = scmp.eq.s32.totalorder %s26, 0
      %p189 = por %p187, %p188
      %s190 = ssub.s32 %s20, %s27
      %p191 = scmp.eq.s32.totalorder %s190, 0
      %s193 = sadd.s32 %s192, 1
      %s194 = scalar_select %p191, %s192, %s193
      %p197 = pneg %p191
      %p198 = scmp.eq.s32.totalorder %s20, 1
      %p199 = por %p197, %p198
      %p200 = scmp.ne.s32.totalorder %s192, %s195
      %p201 = scmp.eq.s32.totalorder %s20, 0
      %p202 = por %p200, %p201
      %p203 = scmp.ne.s32.totalorder %s192, %s195
      %p204 = scmp.eq.s32.totalorder %s25, 1
      %p205 = por %p203, %p204
      %p206 = scmp.ne.s32.totalorder %s195, %s196
      %p207 = scmp.eq.s32.totalorder %s25, 0
      %p208 = por %p206, %p207
      %p209 = scmp.ne.s32.totalorder %s195, %s196
      %p210 = scmp.eq.s32.totalorder %s26, 1
      %p211 = por %p209, %p210
      %p213 = scmp.ne.s32.totalorder %s196, %s212
      %p214 = scmp.eq.s32.totalorder %s26, 0
      %p215 = por %p213, %p214
      %p216 = scmp.le.s32.totalorder 1, %s20
      %p217 = scmp.lt.s32.totalorder %s20, 3
      %p218 = pnand %p216, %p217
      %p219 = pneg %p218
      // Predicated region
      $region9: #{tpu_custom_call.1} parent=5 // pred_check
        _
      $region10: #{tpu_custom_call.1} parent=5 // pred_check_branch
        %221 = sbr.rel (%p218) target = $region12
      $region11: #{tpu_custom_call.1} parent=5 // pred_region
        %s222 = ssub.s32 %s20, 1
        // Predicated region
        $region13: #{tpu_custom_call.1} parent=11 // pred_check
          %p223 = pneg %p67
        $region14: #{tpu_custom_call.1} parent=11 // pred_check_branch
          %225 = sbr.rel (%p223) target = $region16
        $region15: #{tpu_custom_call.1} parent=11 // pred_region
          _
        $region16: #{tpu_custom_call.1} parent=11 // pred_fallthru
          _
        // Predicated region
        $region17: #{tpu_custom_call.1} parent=11 // pred_check
          %p226 = pneg %p88
        $region18: #{tpu_custom_call.1} parent=11 // pred_check_branch
          %228 = sbr.rel (%p226) target = $region20
        $region19: #{tpu_custom_call.1} parent=11 // pred_region
          _
        $region20: #{tpu_custom_call.1} parent=11 // pred_fallthru
          _
        // Predicated region
        $region21: #{tpu_custom_call.1} parent=11 // pred_check
          %p229 = pneg %p109
        $region22: #{tpu_custom_call.1} parent=11 // pred_check_branch
          %231 = sbr.rel (%p229) target = $region24
        $region23: #{tpu_custom_call.1} parent=11 // pred_region
          _
        $region24: #{tpu_custom_call.1} parent=11 // pred_fallthru
          _
        // Predicated region
        $region25: #{tpu_custom_call.1} parent=11 // pred_check
          %p232 = pneg %p130
        $region26: #{tpu_custom_call.1} parent=11 // pred_check_branch
          %234 = sbr.rel (%p232) target = $region28
        $region27: #{tpu_custom_call.1} parent=11 // pred_region
          _
        $region28: #{tpu_custom_call.1} parent=11 // pred_fallthru
          _
      $region12: #{tpu_custom_call.1} parent=5 // pred_fallthru
        _
      %p235 = scmp.lt.s32.totalorder %s20, 2
      // Predicated region
      $region29: #{tpu_custom_call.1} parent=5 // pred_check
        %p236 = pneg %p235
      $region30: #{tpu_custom_call.1} parent=5 // pred_check_branch
        %238 = sbr.rel (%p236) target = $region32
      $region31: #{tpu_custom_call.1} parent=5 // pred_region
        // Predicated region
        $region33: #{tpu_custom_call.1} parent=31 // pred_check
          %p239 = pneg %p40
        $region34: #{tpu_custom_call.1} parent=31 // pred_check_branch
          %241 = sbr.rel (%p239) target = $region36
        $region35: #{tpu_custom_call.1} parent=31 // pred_region
          %p242 = scmp.lt.s32.totalorder %s20, 1
          %s243 = scalar_select %p242, %s20, 1
          %s244 = smul.addr %s243, 4
          %s245 = scalar_lea.vmem %s0, %s244
        $region36: #{tpu_custom_call.1} parent=31 // pred_fallthru
          _
      $region32: #{tpu_custom_call.1} parent=5 // pred_fallthru
        _
      %p246 = scmp.le.s32.totalorder 1, %s20
      %p247 = scmp.lt.s32.totalorder %s20, 3
      %p248 = pnand %p246, %p247
      %p249 = pneg %p248
      // Predicated region
      $region37: #{tpu_custom_call.1} parent=5 // pred_check
        _
      $region38: #{tpu_custom_call.1} parent=5 // pred_check_branch
        %251 = sbr.rel (%p248) target = $region40
      $region39: #{tpu_custom_call.1} parent=5 // pred_region
        %s252 = ssub.s32 %s20, 1
        %p253 = scmp.lt.s32.totalorder %s25, 1
        %s254 = scalar_select %p253, %s25, 1
        %s255 = smul.addr %s254, 4
        %s256 = scalar_lea.vmem %s0, %s255
        %p257 = pneg %p46
        %p258 = pneg %p43
        %p259 = pneg %p67
        %p260 = pneg %p64
        %p261 = pneg %p88
        %p262 = pneg %p85
        %p263 = pneg %p109
        %p264 = pneg %p106
        %p265 = pneg %p130
        %p266 = pneg %p127
        %p267 = pneg %p156
        %p268 = pneg %p153
        %s269 = sand.u32 %s143, 1
        %s270 = scalar_lea.sflag [#allocation3], %s269
        %s271 = sand.u32 %s143, 1
        %s272 = smul.addr %s271, 4
        %s273 = scalar_lea.vmem [#allocation2], %s272
        %p274 = pneg %p182
        %p275 = pneg %p179
        %s276 = sand.u32 %s25, 1
        %s277 = scalar_lea.sflag [#allocation5], %s276
        %s278 = sand.u32 %s169, 1
        %s279 = scalar_lea.vmem [#allocation4], %s278
        %p280 = pneg %p208
        %p281 = pneg %p205
        %s282 = sand.u32 %s25, 1
        %s283 = scalar_lea.sflag [#allocation5], %s282
        %s284 = sand.u32 %s195, 1
        %s285 = scalar_lea.vmem [#allocation6], %s284
        %p286 = scmp.lt.s32.totalorder %s25, 1
        %s287 = scalar_select %p286, %s25, 1
        %s288 = smul.addr %s287, 4
        %s289 = scalar_lea.vmem %s0, %s288
        %v290 = vld [vmem:[%s289] sm:$0xf]
        %v291 = vld [vmem:[%s1] sm:$0xff]
        %v292 = vld [vmem:[%s1 + $0x8] sm:$0xff]
        %v293 = vld [vmem:[%s1 + $0x10] sm:$0xff]
        %v294 = vld [vmem:[%s1 + $0x18] sm:$0xff]
        %v295 = vld [vmem:[%s1 + $0x20] sm:$0xff]
        %v296 = vld [vmem:[%s1 + $0x28] sm:$0xff]
        %v297 = vld [vmem:[%s1 + $0x30] sm:$0xff]
        %v298 = vld [vmem:[%s1 + $0x38] sm:$0xff]
        %v299 = vld [vmem:[%s1 + $0x40] sm:$0xff]
        %v300 = vld [vmem:[%s1 + $0x48] sm:$0xff]
        %v301 = vld [vmem:[%s1 + $0x50] sm:$0xff]
        %v302 = vld [vmem:[%s1 + $0x58] sm:$0xff]
        %v303 = vld [vmem:[%s1 + $0x60] sm:$0xff]
        %v304 = vld [vmem:[%s1 + $0x68] sm:$0xff]
        %v305 = vld [vmem:[%s1 + $0x70] sm:$0xff]
        %v306 = vld [vmem:[%s1 + $0x78] sm:$0xff]
        %v307 = vld [vmem:[%s2] sm:$0xf]
        %vm308 = vcmask 1043456
        %v309 = vsel %vm308, %v290, 0.0
        %v310 = vrot.slane %v309, 4
        %v311 = vadd.f32 %v309, %v310
        %v312 = vrot.slane %v311, 2
        %v313 = vadd.f32 %v311, %v312
        %v314 = vrot.slane %v313, 1
        %v315 = vadd.f32 %v313, %v314
        %316 = vmatpush.msra.mxu0 %v306
        %317 = vmatpush.msra.mxu0 %v305
        %318 = vmatpush.msra.mxu0 %v304
        %319 = vmatpush.msra.mxu0 %v303
        %320 = vmatpush.msra.mxu0 %v302
        %321 = vmatpush.msra.mxu0 %v301
        %322 = vmatpush.msra.mxu0 %v300
        %323 = vmatpush.msra.mxu0 %v299
        %324 = vmatpush.msra.mxu0 %v298
        %325 = vmatpush.msra.mxu0 %v297
        %326 = vmatpush.msra.mxu0 %v296
        %327 = vmatpush.msra.mxu0 %v295
        %328 = vmatpush.msra.mxu0 %v294
        %329 = vmatpush.msra.mxu0 %v293
        %330 = vmatpush.msra.mxu0 %v292
        %331 = vmatpush.msra.mxu0 %v291
        %332 = vmatmul.f32.gmra.mxu0 %v315
        %v333 = vpop.f32.mrf.mxu0
        %v334 = vadd.f32 0.0, %v333
        %335 = vdwg.mxu0
        %v336 = vmul.f32 %v334, 0.0078125
        %vm337 = vcmask 31744
        %v339 = vsel %vm337, %v336, 0
        %v342 = vsel %vm308, %v307, 0
        %344 = vmatpush.msra.mxu0 0.0
        %345 = vmatpush.msra.mxu0 0.0
        %346 = vmatpush.msra.mxu0 0.0
        %347 = vmatpush.msra.mxu0 0.0
        %348 = vmatpush.msra.mxu0 0.0
        %349 = vmatpush.msra.mxu0 0.0
        %350 = vmatpush.msra.mxu0 0.0
        %351 = vmatpush.msra.mxu0 0.0
        %352 = vmatpush.msra.mxu0 0.0
        %353 = vmatpush.msra.mxu0 0.0
        %354 = vmatpush.msra.mxu0 0.0
        %355 = vmatpush.msra.mxu0 0.0
        %356 = vmatpush.msra.mxu0 0.0
        %357 = vmatpush.msra.mxu0 0.0
        %358 = vmatpush.msra.mxu0 0.0
        %359 = vmatpush.msra.mxu0 %v342
        %360 = vmatmul.f32.gmra.mxu0 %v339
        %v361 = vpop.f32.mrf.mxu0
        %v362 = vadd.f32 0.0, %v361
        %363 = vdwg.mxu0
        %v364 = vperm.slane %v362, 0
        %v365 = vsub.f32 %v290, %v364
        %v366 = vmul.f32 %v365, %v365
        %v367 = vsel %vm308, %v366, 0.0
        %v368 = vrot.slane %v367, 4
        %v369 = vadd.f32 %v367, %v368
        %v370 = vrot.slane %v369, 2
        %v371 = vadd.f32 %v369, %v370
        %v372 = vrot.slane %v371, 1
        %v373 = vadd.f32 %v371, %v372
        %374 = vmatpush.msra.mxu0 %v306
        %375 = vmatpush.msra.mxu0 %v305
        %376 = vmatpush.msra.mxu0 %v304
        %377 = vmatpush.msra.mxu0 %v303
        %378 = vmatpush.msra.mxu0 %v302
        %379 = vmatpush.msra.mxu0 %v301
        %380 = vmatpush.msra.mxu0 %v300
        %381 = vmatpush.msra.mxu0 %v299
        %382 = vmatpush.msra.mxu0 %v298
        %383 = vmatpush.msra.mxu0 %v297
        %384 = vmatpush.msra.mxu0 %v296
        %385 = vmatpush.msra.mxu0 %v295
        %386 = vmatpush.msra.mxu0 %v294
        %387 = vmatpush.msra.mxu0 %v293
        %388 = vmatpush.msra.mxu0 %v292
        %389 = vmatpush.msra.mxu0 %v291
        %390 = vmatmul.f32.gmra.mxu0 %v373
        %v391 = vpop.f32.mrf.mxu0
        %v392 = vadd.f32 0.0, %v391
        %393 = vdwg.mxu0
        %v394 = vmul.f32 %v392, 0.0078125
        %v395 = vadd.f32 %v394, 1e-05
        %v396 = vrsqrt.pop %v395
        %v397 = vmul.f32 %v396, %v395
        %v398 = vmul.f32 %v397, %v396
        %v399 = vmul.f32 0.5, %v398
        %v400 = vsub.f32 1.5, %v399
        %v401 = vmul.f32 %v396, %v400
        %v402 = vmul.f32 %v395, %v401
        %vm403 = vcmp.eq.f32.partialorder %v395, inf
        %v404 = vsel %vm403, %v395, %v402
        %vm405 = vcmp.eq.f32.partialorder %v395, 0.0
        %v406 = vand.u32 %v395, 2147483648
        %v407 = vsel %vm405, %v406, %v404
        %v408 = vrcp.pop %v407
        %v409 = vmul.f32 %v407, %v408
        %v410 = vsub.f32 1.0, %v409
        %v411 = vmul.f32 %v408, %v410
        %v412 = vadd.f32 %v408, %v411
        %vm413 = vweird.f32 %v407
        %vm414 = vweird.f32 %v408
        %vm415 = vmor %vm413, %vm414
        %v416 = vsel %vm415, %v408, %v412
        %v417 = vand.u32 2147483647, %v407
        %vm418 = vcmp.eq.f32.partialorder %v417, 8.507059e+37
        %v419 = vand.u32 %v407, 2147483648
        %v420 = vor.u32 1.1754944e-38, %v419
        %v421 = vsel %vm418, %v420, %v416
        %v422 = vmul.f32 1.0, %v421
        %v424 = vsel %vm337, %v422, 0
        %426 = vmatpush.msra.mxu0 0.0
        %427 = vmatpush.msra.mxu0 0.0
        %428 = vmatpush.msra.mxu0 0.0
        %429 = vmatpush.msra.mxu0 0.0
        %430 = vmatpush.msra.mxu0 0.0
        %431 = vmatpush.msra.mxu0 0.0
        %432 = vmatpush.msra.mxu0 0.0
        %433 = vmatpush.msra.mxu0 0.0
        %434 = vmatpush.msra.mxu0 0.0
        %435 = vmatpush.msra.mxu0 0.0
        %436 = vmatpush.msra.mxu0 0.0
        %437 = vmatpush.msra.mxu0 0.0
        %438 = vmatpush.msra.mxu0 0.0
        %439 = vmatpush.msra.mxu0 0.0
        %440 = vmatpush.msra.mxu0 0.0
        %441 = vmatpush.msra.mxu0 %v342
        %442 = vmatmul.f32.gmra.mxu0 %v424
        %v443 = vpop.f32.mrf.mxu0
        %v444 = vadd.f32 0.0, %v443
        %445 = vdwg.mxu0
        %v446 = vld [vmem:[%s3] sm:$0x1]
        %v447 = vmul.f32 %v444, %v446
        %v448 = vperm.slane %v447, 0
        %v449 = vmul.f32 %v365, %v448
        %v450 = vld [vmem:[%s4] sm:$0x1]
        %v452 = vperm.slane %v450, 0
        %v454 = vadd.f32 %v449, %v452
        %455 = vst [vmem:[%s273] sm:$0xf] %v454
        %vm456 = vcmask 24576
        %457 = vst.msk [vmem:[%s279] sm:$0x1] %vm456, %v336
        %458 = vst.msk [vmem:[%s285] sm:$0x1] %vm456, %v407
        %s459 = sand.u32 %s143, 1
        %s460 = scalar_lea.sflag [#allocation3], %s459
        %s461 = sand.u32 %s143, 1
        %s462 = smul.addr %s461, 4
        %s463 = scalar_lea.vmem [#allocation2], %s462
        %s464 = sand.u32 %s25, 1
        %s465 = scalar_lea.sflag [#allocation5], %s464
        %s466 = sand.u32 %s169, 1
        %s467 = scalar_lea.vmem [#allocation4], %s466
        %s468 = sand.u32 %s25, 1
        %s469 = scalar_lea.sflag [#allocation5], %s468
        %s470 = sand.u32 %s195, 1
        %s471 = scalar_lea.vmem [#allocation6], %s470
        // Predicated region
        $region41: #{tpu_custom_call.1} parent=39 // pred_check
          %p472 = pneg %p153
        $region42: #{tpu_custom_call.1} parent=39 // pred_check_branch
          %474 = sbr.rel (%p472) target = $region44
        $region43: #{tpu_custom_call.1} parent=39 // pred_region
          %476 = vsyncadd %s460, 0
          %s477 = smul.addr %s25, 4
          %s478 = scalar_lea.hbm %s5, %s477
          %s480 = sshll.u32 %s463, 4
          %s481 = int_to_ptr.vmem [resolvable:$true] %s480
          %s482 = sshll.u32 %s478, 4
          %s483 = int_to_ptr.hbm [resolvable:$true] %s482
          %485 = dma.vmem_to_hbm [thread:$0]  %s481, 64, %s483, %s460
        $region44: #{tpu_custom_call.1} parent=39 // pred_fallthru
          _
        // Predicated region
        $region45: #{tpu_custom_call.1} parent=39 // pred_check
          %p486 = pneg %p179
        $region46: #{tpu_custom_call.1} parent=39 // pred_check_branch
          %488 = sbr.rel (%p486) target = $region48
        $region47: #{tpu_custom_call.1} parent=39 // pred_region
          %490 = vsyncadd %s465, 0
          %s491 = scalar_lea.hbm %s6, %s25
          %s493 = sshll.u32 %s467, 4
          %s494 = int_to_ptr.vmem [resolvable:$true] %s493
          %s495 = sshll.u32 %s491, 4
          %s496 = int_to_ptr.hbm [resolvable:$true] %s495
          %498 = dma.vmem_to_hbm [thread:$0]  %s494, 16, %s496, %s465
        $region48: #{tpu_custom_call.1} parent=39 // pred_fallthru
          _
        // Predicated region
        $region49: #{tpu_custom_call.1} parent=39 // pred_check
          %p499 = pneg %p205
        $region50: #{tpu_custom_call.1} parent=39 // pred_check_branch
          %501 = sbr.rel (%p499) target = $region52
        $region51: #{tpu_custom_call.1} parent=39 // pred_region
          %503 = vsyncadd %s469, 0
          %s504 = scalar_lea.hbm %s7, %s25
          %s506 = sshll.u32 %s471, 4
          %s507 = int_to_ptr.vmem [resolvable:$true] %s506
          %s508 = sshll.u32 %s504, 4
          %s509 = int_to_ptr.hbm [resolvable:$true] %s508
          %511 = dma.vmem_to_hbm [thread:$0]  %s507, 16, %s509, %s469
        $region52: #{tpu_custom_call.1} parent=39 // pred_fallthru
          _
      $region40: #{tpu_custom_call.1} parent=5 // pred_fallthru
        _
      %p512 = scmp.le.s32.totalorder 2, %s20
      // Predicated region
      $region53: #{tpu_custom_call.1} parent=5 // pred_check
        %p513 = pneg %p512
      $region54: #{tpu_custom_call.1} parent=5 // pred_check_branch
        %515 = sbr.rel (%p513) target = $region56
      $region55: #{tpu_custom_call.1} parent=5 // pred_region
        %s516 = ssub.s32 %s20, 2
        // Predicated region
        $region57: #{tpu_custom_call.1} parent=55 // pred_check
          %p517 = pneg %p159
        $region58: #{tpu_custom_call.1} parent=55 // pred_check_branch
          %519 = sbr.rel (%p517) target = $region60
        $region59: #{tpu_custom_call.1} parent=55 // pred_region
          %s520 = sand.u32 %s144, 1
          %s521 = scalar_lea.sflag [#allocation3], %s520
          %s522 = sand.u32 %s144, 1
          %s523 = smul.addr %s522, 4
          %s524 = scalar_lea.vmem [#allocation2], %s523
          %526 = dma.done %s521, 64
        $region60: #{tpu_custom_call.1} parent=55 // pred_fallthru
          _
        // Predicated region
        $region61: #{tpu_custom_call.1} parent=55 // pred_check
          %p527 = pneg %p185
        $region62: #{tpu_custom_call.1} parent=55 // pred_check_branch
          %529 = sbr.rel (%p527) target = $region64
        $region63: #{tpu_custom_call.1} parent=55 // pred_region
          %s530 = sand.u32 %s26, 1
          %s531 = scalar_lea.sflag [#allocation5], %s530
          %s532 = sand.u32 %s170, 1
          %s533 = scalar_lea.vmem [#allocation4], %s532
          %535 = dma.done %s531, 16
        $region64: #{tpu_custom_call.1} parent=55 // pred_fallthru
          _
        // Predicated region
        $region65: #{tpu_custom_call.1} parent=55 // pred_check
          %p536 = pneg %p211
        $region66: #{tpu_custom_call.1} parent=55 // pred_check_branch
          %538 = sbr.rel (%p536) target = $region68
        $region67: #{tpu_custom_call.1} parent=55 // pred_region
          %s539 = sand.u32 %s26, 1
          %s540 = scalar_lea.sflag [#allocation5], %s539
          %s541 = sand.u32 %s196, 1
          %s542 = scalar_lea.vmem [#allocation6], %s541
          %544 = dma.done %s540, 16
        $region68: #{tpu_custom_call.1} parent=55 // pred_fallthru
          _
      $region56: #{tpu_custom_call.1} parent=5 // pred_fallthru
        _
    $region6: #{tpu_custom_call.1} parent=1 // loop_footer
      %s24 = sadd.s32 1, %s20
    $region7: #{tpu_custom_call.1} parent=1 // loop_footer_branch
      %19 = sbr.rel target = $region3
    $region8: #{tpu_custom_call.1} parent=1 // loop_exit
      _
    %545 = vsyncpa [#allocation3], 1
    %s546 = scalar_lea.sflag [#allocation3], 1
    %547 = vsyncpa %s546, 1
    %548 = vsyncpa [#allocation5], 1
    %s549 = scalar_lea.sflag [#allocation5], 1
    %550 = vsyncpa %s549, 1

</llo_original>
